<compile_context>
chip_gen: v7x
topology: tpu7x:2x2x1
jax: 0.10.0
libtpu: 0.0.40
codegen_flags: <defaults>
</compile_context>

<pallas_src>
import functools

import numpy as np

import jax
import jax.numpy as jnp
from jax.experimental import pallas as pl
from jax.experimental.pallas import tpu as pltpu

_EPS = 1e-12        # F.normalize eps
_OUT_LANES = 128    # lane-dense output row width


def _round_up(x, m):
    return ((x + m - 1) // m) * m


def _contrastive_kernel(text_ref, event_ref, label_ref, weight_ref, out_ref,
                        *, inv_temp):
    """One grid step == VB videos.

    text_ref  : (VB, E, D_pad) padded caption features (zero rows for padding)
    event_ref : (VB, E, D_pad) event features
    label_ref : (VB, E, 1) int32  local gt event index per caption row, -1 = pad
    weight_ref: (VB, E, 1) f32    1/n_valid for valid caption rows, else 0
    out_ref   : (1, 1, 128) f32   per-step partial loss, broadcast across lanes
    """
    VB, E, _ = text_ref.shape

    t = text_ref[...].astype(jnp.float32)      # (VB, E, D)
    e = event_ref[...].astype(jnp.float32)     # (VB, E, D)
    labels = label_ref[...]                    # (VB, E, 1) int32
    w = weight_ref[...]                        # (VB, E, 1) f32

    eps2 = jnp.float32(_EPS * _EPS)
    # F.normalize(p=2, dim=1): x * rsqrt(max(||x||^2, eps^2))  (== x / max(||x||, eps)).
    # 1/temperature folded into the event-side scale (rsqrt -> EUP slot).
    t_scale = jax.lax.rsqrt(
        jnp.maximum(jnp.sum(t * t, axis=-1, keepdims=True), eps2))
    e_scale = jax.lax.rsqrt(
        jnp.maximum(jnp.sum(e * e, axis=-1, keepdims=True), eps2)
    ) * jnp.float32(inv_temp)

    # bf16 operands hit the native MXU path; accumulation stays f32.
    t_n = (t * t_scale).astype(jnp.bfloat16)
    e_n = (e * e_scale).astype(jnp.bfloat16)

    # Batched per-video matmul -> (VB, E, E). No cross-video block, so no
    # -1e30 mask and no full-matrix iota // E machinery.
    logits = jnp.einsum('ved,vfd->vef', t_n, e_n,
                        preferred_element_type=jnp.float32)

    # gt logit: lane-iota over event columns vs the label vector.
    col = jax.lax.broadcasted_iota(jnp.int32, (1, 1, E), 2)
    gt = jnp.sum(jnp.where(col == labels, logits, jnp.float32(0.0)),
                 axis=-1, keepdims=True)                       # (VB, E, 1)

    # Row-wise softmax cross entropy.
    m = jnp.max(logits, axis=-1, keepdims=True)                # (VB, E, 1)
    lse = m + jnp.log(jnp.sum(jnp.exp(logits - m), axis=-1, keepdims=True))
    ce = lse - gt                                              # (VB, E, 1)

    # Per-step partial loss (weights already encode 1/n_valid and padding 0s).
    per_video = jnp.sum(ce * w, axis=1, keepdims=True)         # (VB, 1, 1)
    step = jnp.sum(per_video, axis=0, keepdims=True)           # (1, 1, 1)

    # Lane-dense store: broadcast across the full 128-lane output row.
    out_ref[...] = jnp.zeros(out_ref.shape, jnp.float32) + step


def _prepare_host_inputs(text_embed_list, matching_indices, B, E, D,
                         B_pad, D_pad, dtype):
    """Pad ragged captions into (B_pad,E,D_pad); build labels / row weights (glue)."""
    text_pad = np.zeros((B_pad, E, D_pad), np.float32)
    labels = np.full((B_pad, E, 1), -1, np.int32)
    weights = np.zeros((B_pad, E, 1), np.float32)
    for i, (feat_ids, cap_ids) in enumerate(matching_indices):
        feat_ids = np.asarray(feat_ids, np.int32)
        cap_ids = np.asarray(cap_ids, np.int32)
        n = int(feat_ids.shape[0])
        if n == 0:  # empty matching list: contributes exactly 0, no 1/0 hazard
            continue
        text_pad[i, :n, :D] = np.asarray(text_embed_list[i], np.float32)[cap_ids]
        labels[i, :n, 0] = feat_ids
        weights[i, :n, 0] = 1.0 / n
    return (jnp.asarray(text_pad, dtype=dtype),
            jnp.asarray(labels),
            jnp.asarray(weights))


def _choose_vb(B, E, D_pad, itemsize):
    """Videos per grid step: sized by a VMEM budget, capped so G >= 2 when B >= 2."""
    budget = 8 * 1024 * 1024  # well inside 16 MiB (v5e) / 32 MiB (v6e,v7x) scoped VMEM
    per_video = (2 * 2 * E * D_pad * itemsize   # text+event blocks, double-buffered
                 + 2 * E * D_pad * 4            # f32 upcasts
                 + 2 * E * D_pad * 2            # bf16 normalized operands
                 + 4 * E * E * 4                # logits + softmax temporaries
                 + 8 * E)                       # labels / weights / scales
    vb = max(1, budget // max(per_video, 1))
    vb = int(min(vb, 128, B))
    if B >= 2:
        vb = min(vb, -(-B // 2))  # ceil(B/2) -> at least two grid steps (v7x: 2 TCs)
    return max(1, vb)


def contrastive_loss(text_embed_list, event_embed, matching_indices,
                     temperature=0.1):
    """Pallas implementation of ContrastiveCriterion.forward (default flags)."""
    B, E, D = event_embed.shape
    D_pad = _round_up(D, 128)                       # fill the lane axis
    dtype = event_embed.dtype                       # keep bf16/f32 through the DMA
    VB = _choose_vb(B, E, D_pad, jnp.dtype(dtype).itemsize)
    B_pad = _round_up(B, VB)
    G = B_pad // VB

    text_pad, labels, weights = _prepare_host_inputs(
        text_embed_list, matching_indices, B, E, D, B_pad, D_pad, dtype)
    event_pad = jnp.pad(event_embed, ((0, B_pad - B), (0, 0), (0, D_pad - D)))

    kernel = functools.partial(_contrastive_kernel,
                               inv_temp=float(1.0 / temperature))

    partial = pl.pallas_call(
        kernel,
        out_shape=jax.ShapeDtypeStruct((G, 1, _OUT_LANES), jnp.float32),
        grid=(G,),
        in_specs=[
            pl.BlockSpec((VB, E, D_pad), lambda i: (i, 0, 0)),
            pl.BlockSpec((VB, E, D_pad), lambda i: (i, 0, 0)),
            pl.BlockSpec((VB, E, 1), lambda i: (i, 0, 0)),
            pl.BlockSpec((VB, E, 1), lambda i: (i, 0, 0)),
        ],
        out_specs=pl.BlockSpec((1, 1, _OUT_LANES), lambda i: (i, 0, 0)),
        compiler_params=pltpu.CompilerParams(
            dimension_semantics=("parallel",)),
    )(text_pad, event_pad, labels, weights)

    # Mean over the *true* batch size (padded videos / rows contribute exactly 0).
    return jnp.sum(partial[:, 0, 0]) / jnp.float32(B)


def reference_loss(text_embed_list, event_embed, matching_indices,
                   temperature=0.1):
    """Plain-numpy replica of the PyTorch forward (default flags), for checking."""
    event_embed = np.asarray(event_embed, np.float64)
    B, E, D = event_embed.shape
    event_features = event_embed.reshape(-1, D)
    text_feats, gt_labels, gt_event_num = [], [], []
    for i, (feat_ids, cap_ids) in enumerate(matching_indices):
        gt_event_num.append(len(feat_ids))
        text_feats.append(np.asarray(text_embed_list[i], np.float64)[np.asarray(cap_ids)])
        gt_labels.append(np.asarray(feat_ids))
    text_feats = np.concatenate(text_feats, 0)
    gt_labels = np.concatenate(gt_labels, 0)

    tn = text_feats / np.maximum(
        np.linalg.norm(text_feats, axis=1, keepdims=True), _EPS)
    en = event_features / np.maximum(
        np.linalg.norm(event_features, axis=1, keepdims=True), _EPS)
    logits = (tn @ en.T) / temperature

    loss, base = 0.0, 0
    for i in range(B):
        n = gt_event_num[i]
        cl = logits[base:base + n, i * E:(i + 1) * E]
        lbl = gt_labels[base:base + n]
        m = cl.max(axis=1, keepdims=True)
        lse = (m + np.log(np.sum(np.exp(cl - m), axis=1, keepdims=True)))[:, 0]
        loss += np.mean(lse - cl[np.arange(n), lbl])
        base += n
    return loss / B


if __name__ == "__main__":
    B, E, D = 2, 8, 32  # batch, max_event_num, contrastive_hidden_size
    key = jax.random.PRNGKey(0)
    k_event, k_text = jax.random.split(key)

    event_embed = jax.random.normal(k_event, (B, E, D), jnp.float32)

    # ragged per-video caption features, as in the PyTorch module
    num_caps = [5, 3]
    text_embed_list = [
        jax.random.normal(jax.random.fold_in(k_text, i), (num_caps[i], D),
                          jnp.float32)
        for i in range(B)
    ]
    # (feat_ids, cap_ids) per video
    matching_indices = [
        (np.array([0, 2, 4, 5, 7]), np.array([0, 1, 2, 3, 4])),
        (np.array([1, 3, 6]), np.array([2, 0, 1])),
    ]

    loss = contrastive_loss(text_embed_list, event_embed, matching_indices,
                            temperature=0.1)
    loss = jax.block_until_ready(loss)

    ref = reference_loss([np.asarray(t) for t in text_embed_list],
                         np.asarray(event_embed), matching_indices,
                         temperature=0.1)
    # Tolerance relaxed vs the float64 reference because the MXU operands are bf16.
    assert abs(float(loss) - float(ref)) < 2e-2 * max(1.0, abs(float(ref))), (
        float(loss), float(ref))
    print("KERNEL_OK")
</pallas_src>

<mosaic_0001>
module attributes {stable_mosaic.version = 11 : i64} {
  func.func @_contrastive_kernel(%arg0: i32, %arg1: memref<1x8x128xf32, #tpu.memory_space<vmem>>, %arg2: memref<1x8x128xf32, #tpu.memory_space<vmem>>, %arg3: memref<1x8x1xi32, #tpu.memory_space<vmem>>, %arg4: memref<1x8x1xf32, #tpu.memory_space<vmem>>, %arg5: memref<1x1x128xf32, #tpu.memory_space<vmem>>) attributes {dimension_semantics = [#tpu.dimension_semantics<parallel>], iteration_bounds = array<i64: 2>, scalar_prefetch = 0 : i64, scratch_operands = 0 : i64, tpu.core_type = #tpu.core_type<tc>, window_params = [{transform_indices = @transform_0, window_bounds = array<i64: 1, 8, 128>}, {transform_indices = @transform_1, window_bounds = array<i64: 1, 8, 128>}, {transform_indices = @transform_2, window_bounds = array<i64: 1, 8, 1>}, {transform_indices = @transform_3, window_bounds = array<i64: 1, 8, 1>}, {transform_indices = @transform_4, window_bounds = array<i64: 1, 1, 128>}]} {
    %c0 = arith.constant 0 : index
    %c0_0 = arith.constant 0 : index
    %c0_1 = arith.constant 0 : index
    %0 = vector.load %arg1[%c0, %c0_0, %c0_1] : memref<1x8x128xf32, #tpu.memory_space<vmem>>, vector<1x8x128xf32>
    %c0_2 = arith.constant 0 : index
    %c0_3 = arith.constant 0 : index
    %c0_4 = arith.constant 0 : index
    %1 = vector.load %arg2[%c0_2, %c0_3, %c0_4] : memref<1x8x128xf32, #tpu.memory_space<vmem>>, vector<1x8x128xf32>
    %c0_5 = arith.constant 0 : index
    %c0_6 = arith.constant 0 : index
    %c0_7 = arith.constant 0 : index
    %2 = vector.load %arg3[%c0_5, %c0_6, %c0_7] : memref<1x8x1xi32, #tpu.memory_space<vmem>>, vector<1x8x1xi32>
    %c0_8 = arith.constant 0 : index
    %c0_9 = arith.constant 0 : index
    %c0_10 = arith.constant 0 : index
    %3 = vector.load %arg4[%c0_8, %c0_9, %c0_10] : memref<1x8x1xf32, #tpu.memory_space<vmem>>, vector<1x8x1xf32>
    %4 = arith.mulf %0, %0 : vector<1x8x128xf32>
    %cst = arith.constant dense<0.000000e+00> : vector<1x8xf32>
    %5 = vector.multi_reduction <add>, %4, %cst [2] : vector<1x8x128xf32> to vector<1x8xf32>
    %6 = vector.shape_cast %5 : vector<1x8xf32> to vector<1x8x1xf32>
    %cst_11 = arith.constant 1.000000e-24 : f32
    %7 = vector.broadcast %cst_11 : f32 to vector<1x8x1xf32>
    %8 = arith.maximumf %6, %7 : vector<1x8x1xf32>
    %9 = math.rsqrt %8 : vector<1x8x1xf32>
    %10 = arith.mulf %1, %1 : vector<1x8x128xf32>
    %cst_12 = arith.constant dense<0.000000e+00> : vector<1x8xf32>
    %11 = vector.multi_reduction <add>, %10, %cst_12 [2] : vector<1x8x128xf32> to vector<1x8xf32>
    %12 = vector.shape_cast %11 : vector<1x8xf32> to vector<1x8x1xf32>
    %cst_13 = arith.constant 1.000000e-24 : f32
    %13 = vector.broadcast %cst_13 : f32 to vector<1x8x1xf32>
    %14 = arith.maximumf %12, %13 : vector<1x8x1xf32>
    %15 = math.rsqrt %14 : vector<1x8x1xf32>
    %cst_14 = arith.constant 1.000000e+01 : f32
    %16 = vector.broadcast %cst_14 : f32 to vector<1x8x1xf32>
    %17 = arith.mulf %15, %16 : vector<1x8x1xf32>
    %18 = vector.broadcast %9 : vector<1x8x1xf32> to vector<1x8x128xf32>
    %19 = arith.mulf %0, %18 : vector<1x8x128xf32>
    %20 = arith.truncf %19 : vector<1x8x128xf32> to vector<1x8x128xbf16>
    %21 = vector.broadcast %17 : vector<1x8x1xf32> to vector<1x8x128xf32>
    %22 = arith.mulf %1, %21 : vector<1x8x128xf32>
    %23 = arith.truncf %22 : vector<1x8x128xf32> to vector<1x8x128xbf16>
    "tpu.trace_start"() <{level = 10 : i32, message = "ved,vfd->vef"}> : () -> ()
    %cst_15 = arith.constant dense<0.000000e+00> : vector<1x8x8xf32>
    %24 = tpu.matmul %20, %23, %cst_15 {dimension_numbers = #tpu.dot_dimension_numbers<[2], [2], [1], [1], [0, 0, 0, 1, 1, 1], [0], [0]>} : vector<1x8x128xbf16>, vector<1x8x128xbf16>, vector<1x8x8xf32> -> vector<1x8x8xf32>
    "tpu.trace_stop"() : () -> ()
    %25 = tpu.iota {dimensions = array<i32: 2>} : vector<1x1x8xi32>
    %26 = vector.broadcast %25 : vector<1x1x8xi32> to vector<1x8x8xi32>
    %27 = vector.broadcast %2 : vector<1x8x1xi32> to vector<1x8x8xi32>
    %28 = arith.cmpi eq, %26, %27 : vector<1x8x8xi32>
    %cst_16 = arith.constant 0.000000e+00 : f32
    %29 = vector.broadcast %cst_16 : f32 to vector<1x8x8xf32>
    %30 = arith.select %28, %24, %29 : vector<1x8x8xi1>, vector<1x8x8xf32>
    %cst_17 = arith.constant dense<0.000000e+00> : vector<1x8xf32>
    %31 = vector.multi_reduction <add>, %30, %cst_17 [2] : vector<1x8x8xf32> to vector<1x8xf32>
    %32 = vector.shape_cast %31 : vector<1x8xf32> to vector<1x8x1xf32>
    %cst_18 = arith.constant dense<0xFF800000> : vector<1x8xf32>
    %33 = vector.multi_reduction <maximumf>, %24, %cst_18 [2] : vector<1x8x8xf32> to vector<1x8xf32>
    %34 = vector.shape_cast %33 : vector<1x8xf32> to vector<1x8x1xf32>
    %35 = vector.broadcast %34 : vector<1x8x1xf32> to vector<1x8x8xf32>
    %36 = arith.subf %24, %35 : vector<1x8x8xf32>
    %37 = math.exp %36 : vector<1x8x8xf32>
    %cst_19 = arith.constant dense<0.000000e+00> : vector<1x8xf32>
    %38 = vector.multi_reduction <add>, %37, %cst_19 [2] : vector<1x8x8xf32> to vector<1x8xf32>
    %39 = vector.shape_cast %38 : vector<1x8xf32> to vector<1x8x1xf32>
    %40 = math.log %39 : vector<1x8x1xf32>
    %41 = arith.addf %34, %40 : vector<1x8x1xf32>
    %42 = arith.subf %41, %32 : vector<1x8x1xf32>
    %43 = arith.mulf %42, %3 : vector<1x8x1xf32>
    %cst_20 = arith.constant dense<0.000000e+00> : vector<1x1xf32>
    %44 = vector.multi_reduction <add>, %43, %cst_20 [1] : vector<1x8x1xf32> to vector<1x1xf32>
    %45 = vector.shape_cast %44 : vector<1x1xf32> to vector<1x1x1xf32>
    %cst_21 = arith.constant dense<0.000000e+00> : vector<1x1xf32>
    %46 = vector.multi_reduction <add>, %45, %cst_21 [0] : vector<1x1x1xf32> to vector<1x1xf32>
    %47 = vector.shape_cast %46 : vector<1x1xf32> to vector<1x1x1xf32>
    %cst_22 = arith.constant 0.000000e+00 : f32
    %48 = vector.broadcast %cst_22 : f32 to vector<1x1x128xf32>
    %49 = vector.broadcast %47 : vector<1x1x1xf32> to vector<1x1x128xf32>
    %50 = arith.addf %48, %49 : vector<1x1x128xf32>
    %c0_23 = arith.constant 0 : index
    %c0_24 = arith.constant 0 : index
    %c0_25 = arith.constant 0 : index
    %51 = vector.load %arg5[%c0_23, %c0_24, %c0_25] : memref<1x1x128xf32, #tpu.memory_space<vmem>>, vector<1x1x128xf32>
    tpu.vector_store %arg5[%c0_23, %c0_24, %c0_25], %50 {strides = array<i32>} : memref<1x1x128xf32, #tpu.memory_space<vmem>>, vector<1x1x128xf32>,
    return
  }
  func.func @transform_0(%arg0: i32) -> (i32, i32, i32) {
    %c0_i32 = arith.constant 0 : i32
    %c0_i32_0 = arith.constant 0 : i32
    %c0_i32_1 = arith.constant 0 : i32
    return %arg0, %c0_i32, %c0_i32_0 : i32, i32, i32
  }
  func.func @transform_1(%arg0: i32) -> (i32, i32, i32) {
    %c0_i32 = arith.constant 0 : i32
    %c0_i32_0 = arith.constant 0 : i32
    %c0_i32_1 = arith.constant 0 : i32
    return %arg0, %c0_i32, %c0_i32_0 : i32, i32, i32
  }
  func.func @transform_2(%arg0: i32) -> (i32, i32, i32) {
    %c0_i32 = arith.constant 0 : i32
    %c0_i32_0 = arith.constant 0 : i32
    %c0_i32_1 = arith.constant 0 : i32
    return %arg0, %c0_i32, %c0_i32_0 : i32, i32, i32
  }
  func.func @transform_3(%arg0: i32) -> (i32, i32, i32) {
    %c0_i32 = arith.constant 0 : i32
    %c0_i32_0 = arith.constant 0 : i32
    %c0_i32_1 = arith.constant 0 : i32
    return %arg0, %c0_i32, %c0_i32_0 : i32, i32, i32
  }
  func.func @transform_4(%arg0: i32) -> (i32, i32, i32) {
    %c0_i32 = arith.constant 0 : i32
    %c0_i32_0 = arith.constant 0 : i32
    %c0_i32_1 = arith.constant 0 : i32
    return %arg0, %c0_i32, %c0_i32_0 : i32, i32, i32
  }
}

</mosaic_0001>

<llo_original>
// kernel: tpu_custom_call.1
$region0: #{tpu_custom_call.1}
  #allocation0 [shape = 'u32[]', space=smem, size = 0x4, offset = 0x4, fixed_abs, tag = 'smem constant byte address 0x4 - core index']
  #allocation1 [shape = 'u32[144,128]{1,0:T(1,128)}', space=vmem, size = 0x12000, scoped, tag = 'internal scratch']
  %s0 = inlined_call_operand.vmem [shape: f32[2,8,128], index: 0, kind: input, shape index: {}]
  %s1 = inlined_call_operand.vmem [shape: f32[2,8,128], index: 1, kind: input, shape index: {}]
  %s2 = inlined_call_operand.vmem [shape: s32[2,8,1], index: 2, kind: input, shape index: {}]
  %s3 = inlined_call_operand.vmem [shape: f32[2,8,1], index: 3, kind: input, shape index: {}]
  %s4 = inlined_call_operand.hbm [shape: f32[2,1,128], index: 4, kind: output, shape index: {}]
  %s5 = sld [smem:[#allocation0]]
  $region49: #{tpu_custom_call.1} parent=0
    _
  %s7 = ssub.s32 1, %s5
  %s8 = scalar_select 0, %s7, %s5
  $region1: #{tpu_custom_call.1} parent=0
    #allocation2 [shape = 'u8[1024]{0}', space=vmem, size = 0x400, scoped, tag = 'output window, operand 0']
    #allocation3 [shape = 's32[2]{0}', space=sflag, size = 0x8, scoped, tag = 'scoped memory for tpu_custom_call.1']
    %9 = vsyncpa [#allocation3], 0
    %s10 = scalar_lea.sflag [#allocation3], 1
    %11 = vsyncpa %s10, 0
    loop: start=0, step=1, limit=4
    $region2: #{tpu_custom_call.1} parent=1 // loop_pre_header
      _
    $region3: #{tpu_custom_call.1} parent=1 // loop_header
      %s13 = sphi 0, %s17
      %p14 = scmp.ge.s32.totalorder %s13, 4
      %s23 = sphi 0, %s25
      %s26 = sphi 0, %s23
      %s27 = sphi 0, %s26
      %s43 = sphi 0, %s27
      %s49 = sphi 0, %s51
      %s52 = sphi 0, %s49
      %s53 = sphi 0, %s52
      %s69 = sphi 0, %s53
      %s75 = sphi 0, %s77
      %s78 = sphi 0, %s75
      %s79 = sphi 0, %s78
      %s95 = sphi 0, %s79
      %s101 = sphi 0, %s103
      %s104 = sphi 0, %s101
      %s105 = sphi 0, %s104
      %s121 = sphi 0, %s105
      %s127 = sphi 0, %s129
      %s130 = sphi 0, %s127
      %s131 = sphi 0, %s130
      %s147 = sphi 0, %s131
    $region4: #{tpu_custom_call.1} parent=1 // loop_header_branch
      %16 = sbr.rel (%p14) target = $region8
    $region5: #{tpu_custom_call.1} parent=1 // loop_body
      %s18 = ssub.s32 %s13, 1
      %s19 = ssub.s32 %s13, 2
      %s20 = sadd.s32 %s13, 1
      %s21 = ssub.s32 %s13, %s20
      %p22 = scmp.eq.s32.totalorder %s21, 0
      %s24 = sadd.s32 %s23, 1
      %s25 = scalar_select %p22, %s23, %s24
      %p28 = pneg %p22
      %p29 = scmp.eq.s32.totalorder %s13, 1
      %p30 = por %p28, %p29
      %p31 = scmp.ne.s32.totalorder %s23, %s26
      %p32 = scmp.eq.s32.totalorder %s13, 0
      %p33 = por %p31, %p32
      %p34 = scmp.ne.s32.totalorder %s23, %s26
      %p35 = scmp.eq.s32.totalorder %s18, 1
      %p36 = por %p34, %p35
      %p37 = scmp.ne.s32.totalorder %s26, %s27
      %p38 = scmp.eq.s32.totalorder %s18, 0
      %p39 = por %p37, %p38
      %p40 = scmp.ne.s32.totalorder %s26, %s27
      %p41 = scmp.eq.s32.totalorder %s19, 1
      %p42 = por %p40, %p41
      %p44 = scmp.ne.s32.totalorder %s27, %s43
      %p45 = scmp.eq.s32.totalorder %s19, 0
      %p46 = por %p44, %p45
      %s47 = ssub.s32 %s13, %s20
      %p48 = scmp.eq.s32.totalorder %s47, 0
      %s50 = sadd.s32 %s49, 1
      %s51 = scalar_select %p48, %s49, %s50
      %p54 = pneg %p48
      %p55 = scmp.eq.s32.totalorder %s13, 1
      %p56 = por %p54, %p55
      %p57 = scmp.ne.s32.totalorder %s49, %s52
      %p58 = scmp.eq.s32.totalorder %s13, 0
      %p59 = por %p57, %p58
      %p60 = scmp.ne.s32.totalorder %s49, %s52
      %p61 = scmp.eq.s32.totalorder %s18, 1
      %p62 = por %p60, %p61
      %p63 = scmp.ne.s32.totalorder %s52, %s53
      %p64 = scmp.eq.s32.totalorder %s18, 0
      %p65 = por %p63, %p64
      %p66 = scmp.ne.s32.totalorder %s52, %s53
      %p67 = scmp.eq.s32.totalorder %s19, 1
      %p68 = por %p66, %p67
      %p70 = scmp.ne.s32.totalorder %s53, %s69
      %p71 = scmp.eq.s32.totalorder %s19, 0
      %p72 = por %p70, %p71
      %s73 = ssub.s32 %s13, %s20
      %p74 = scmp.eq.s32.totalorder %s73, 0
      %s76 = sadd.s32 %s75, 1
      %s77 = scalar_select %p74, %s75, %s76
      %p80 = pneg %p74
      %p81 = scmp.eq.s32.totalorder %s13, 1
      %p82 = por %p80, %p81
      %p83 = scmp.ne.s32.totalorder %s75, %s78
      %p84 = scmp.eq.s32.totalorder %s13, 0
      %p85 = por %p83, %p84
      %p86 = scmp.ne.s32.totalorder %s75, %s78
      %p87 = scmp.eq.s32.totalorder %s18, 1
      %p88 = por %p86, %p87
      %p89 = scmp.ne.s32.totalorder %s78, %s79
      %p90 = scmp.eq.s32.totalorder %s18, 0
      %p91 = por %p89, %p90
      %p92 = scmp.ne.s32.totalorder %s78, %s79
      %p93 = scmp.eq.s32.totalorder %s19, 1
      %p94 = por %p92, %p93
      %p96 = scmp.ne.s32.totalorder %s79, %s95
      %p97 = scmp.eq.s32.totalorder %s19, 0
      %p98 = por %p96, %p97
      %s99 = ssub.s32 %s13, %s20
      %p100 = scmp.eq.s32.totalorder %s99, 0
      %s102 = sadd.s32 %s101, 1
      %s103 = scalar_select %p100, %s101, %s102
      %p106 = pneg %p100
      %p107 = scmp.eq.s32.totalorder %s13, 1
      %p108 = por %p106, %p107
      %p109 = scmp.ne.s32.totalorder %s101, %s104
      %p110 = scmp.eq.s32.totalorder %s13, 0
      %p111 = por %p109, %p110
      %p112 = scmp.ne.s32.totalorder %s101, %s104
      %p113 = scmp.eq.s32.totalorder %s18, 1
      %p114 = por %p112, %p113
      %p115 = scmp.ne.s32.totalorder %s104, %s105
      %p116 = scmp.eq.s32.totalorder %s18, 0
      %p117 = por %p115, %p116
      %p118 = scmp.ne.s32.totalorder %s104, %s105
      %p119 = scmp.eq.s32.totalorder %s19, 1
      %p120 = por %p118, %p119
      %p122 = scmp.ne.s32.totalorder %s105, %s121
      %p123 = scmp.eq.s32.totalorder %s19, 0
      %p124 = por %p122, %p123
      %s125 = ssub.s32 %s13, %s20
      %p126 = scmp.eq.s32.totalorder %s125, 0
      %s128 = sadd.s32 %s127, 1
      %s129 = scalar_select %p126, %s127, %s128
      %p132 = pneg %p126
      %p133 = scmp.eq.s32.totalorder %s13, 1
      %p134 = por %p132, %p133
      %p135 = scmp.ne.s32.totalorder %s127, %s130
      %p136 = scmp.eq.s32.totalorder %s13, 0
      %p137 = por %p135, %p136
      %p138 = scmp.ne.s32.totalorder %s127, %s130
      %p139 = scmp.eq.s32.totalorder %s18, 1
      %p140 = por %p138, %p139
      %p141 = scmp.ne.s32.totalorder %s130, %s131
      %p142 = scmp.eq.s32.totalorder %s18, 0
      %p143 = por %p141, %p142
      %p144 = scmp.ne.s32.totalorder %s130, %s131
      %p145 = scmp.eq.s32.totalorder %s19, 1
      %p146 = por %p144, %p145
      %p148 = scmp.ne.s32.totalorder %s131, %s147
      %p149 = scmp.eq.s32.totalorder %s19, 0
      %p150 = por %p148, %p149
      %p151 = scmp.le.s32.totalorder 1, %s13
      %p152 = scmp.lt.s32.totalorder %s13, 3
      %p153 = pnand %p151, %p152
      %p154 = pneg %p153
      // Predicated region
      $region9: #{tpu_custom_call.1} parent=5 // pred_check
        _
      $region10: #{tpu_custom_call.1} parent=5 // pred_check_branch
        %156 = sbr.rel (%p153) target = $region12
      $region11: #{tpu_custom_call.1} parent=5 // pred_region
        %s157 = ssub.s32 %s13, 1
      $region12: #{tpu_custom_call.1} parent=5 // pred_fallthru
        _
      %p158 = scmp.lt.s32.totalorder %s13, 2
      // Predicated region
      $region13: #{tpu_custom_call.1} parent=5 // pred_check
        %p159 = pneg %p158
      $region14: #{tpu_custom_call.1} parent=5 // pred_check_branch
        %161 = sbr.rel (%p159) target = $region16
      $region15: #{tpu_custom_call.1} parent=5 // pred_region
        // Predicated region
        $region17: #{tpu_custom_call.1} parent=15 // pred_check
          %p162 = pneg %p33
        $region18: #{tpu_custom_call.1} parent=15 // pred_check_branch
          %164 = sbr.rel (%p162) target = $region20
        $region19: #{tpu_custom_call.1} parent=15 // pred_region
          %p165 = scmp.lt.s32.totalorder %s13, 1
          %s166 = scalar_select %p165, %s13, 1
          %s167 = smul.addr %s166, 8
          %s168 = scalar_lea.vmem %s0, %s167
        $region20: #{tpu_custom_call.1} parent=15 // pred_fallthru
          _
        // Predicated region
        $region21: #{tpu_custom_call.1} parent=15 // pred_check
          %p169 = pneg %p59
        $region22: #{tpu_custom_call.1} parent=15 // pred_check_branch
          %171 = sbr.rel (%p169) target = $region24
        $region23: #{tpu_custom_call.1} parent=15 // pred_region
          %p172 = scmp.lt.s32.totalorder %s13, 1
          %s173 = scalar_select %p172, %s13, 1
          %s174 = smul.addr %s173, 8
          %s175 = scalar_lea.vmem %s1, %s174
        $region24: #{tpu_custom_call.1} parent=15 // pred_fallthru
          _
        // Predicated region
        $region25: #{tpu_custom_call.1} parent=15 // pred_check
          %p176 = pneg %p85
        $region26: #{tpu_custom_call.1} parent=15 // pred_check_branch
          %178 = sbr.rel (%p176) target = $region28
        $region27: #{tpu_custom_call.1} parent=15 // pred_region
          %p179 = scmp.lt.s32.totalorder %s13, 1
          %s180 = scalar_select %p179, %s13, 1
          %s181 = smul.addr %s180, 8
          %s182 = scalar_lea.vmem %s2, %s181
        $region28: #{tpu_custom_call.1} parent=15 // pred_fallthru
          _
        // Predicated region
        $region29: #{tpu_custom_call.1} parent=15 // pred_check
          %p183 = pneg %p111
        $region30: #{tpu_custom_call.1} parent=15 // pred_check_branch
          %185 = sbr.rel (%p183) target = $region32
        $region31: #{tpu_custom_call.1} parent=15 // pred_region
          %p186 = scmp.lt.s32.totalorder %s13, 1
          %s187 = scalar_select %p186, %s13, 1
          %s188 = smul.addr %s187, 8
          %s189 = scalar_lea.vmem %s3, %s188
        $region32: #{tpu_custom_call.1} parent=15 // pred_fallthru
          _
      $region16: #{tpu_custom_call.1} parent=5 // pred_fallthru
        _
      %p190 = scmp.le.s32.totalorder 1, %s13
      %p191 = scmp.lt.s32.totalorder %s13, 3
      %p192 = pnand %p190, %p191
      %p193 = pneg %p192
      // Predicated region
      $region33: #{tpu_custom_call.1} parent=5 // pred_check
        _
      $region34: #{tpu_custom_call.1} parent=5 // pred_check_branch
        %195 = sbr.rel (%p192) target = $region36
      $region35: #{tpu_custom_call.1} parent=5 // pred_region
        %s196 = ssub.s32 %s13, 1
        %p197 = scmp.lt.s32.totalorder %s18, 1
        %s198 = scalar_select %p197, %s18, 1
        %s199 = smul.addr %s198, 8
        %s200 = scalar_lea.vmem %s0, %s199
        %p201 = pneg %p39
        %p202 = pneg %p36
        %p203 = scmp.lt.s32.totalorder %s18, 1
        %s204 = scalar_select %p203, %s18, 1
        %s205 = smul.addr %s204, 8
        %s206 = scalar_lea.vmem %s1, %s205
        %p207 = pneg %p65
        %p208 = pneg %p62
        %p209 = scmp.lt.s32.totalorder %s18, 1
        %s210 = scalar_select %p209, %s18, 1
        %s211 = smul.addr %s210, 8
        %s212 = scalar_lea.vmem %s2, %s211
        %p213 = pneg %p91
        %p214 = pneg %p88
        %p215 = scmp.lt.s32.totalorder %s18, 1
        %s216 = scalar_select %p215, %s18, 1
        %s217 = smul.addr %s216, 8
        %s218 = scalar_lea.vmem %s3, %s217
        %p219 = pneg %p117
        %p220 = pneg %p114
        %p221 = pneg %p143
        %p222 = pneg %p140
        %s223 = sand.u32 %s130, 1
        %s224 = scalar_lea.sflag [#allocation3], %s223
        %s225 = sand.u32 %s130, 1
        %s226 = scalar_lea.vmem [#allocation2], %s225
        %p227 = scmp.lt.s32.totalorder %s18, 1
        %s228 = scalar_select %p227, %s18, 1
        %s229 = smul.addr %s228, 8
        %s230 = scalar_lea.vmem %s0, %s229
        %p231 = scmp.lt.s32.totalorder %s18, 1
        %s232 = scalar_select %p231, %s18, 1
        %s233 = smul.addr %s232, 8
        %s234 = scalar_lea.vmem %s1, %s233
        %p235 = scmp.lt.s32.totalorder %s18, 1
        %s236 = scalar_select %p235, %s18, 1
        %s237 = smul.addr %s236, 8
        %s238 = scalar_lea.vmem %s2, %s237
        %p239 = scmp.lt.s32.totalorder %s18, 1
        %s240 = scalar_select %p239, %s18, 1
        %s241 = smul.addr %s240, 8
        %s242 = scalar_lea.vmem %s3, %s241
        %v244 = vld [vmem:[%s230] sm:$0xff]
        %v245 = vld [vmem:[%s234] sm:$0xff]
        %v246 = vld [vmem:[%s238] sm:$0xff]
        %v247 = vld [vmem:[%s242] sm:$0xff]
        %v248 = vmul.f32 %v244, %v244
        %249 = vadd.xlane.f32.xlu0 %v248
        %v250 = vpop.xlane.xlu0 %249
        %v251 = vmax.f32 %v250, 1e-24
        %v252 = vrsqrt.pop %v251
        %v253 = vmul.f32 %v245, %v245
        %254 = vadd.xlane.f32.xlu0 %v253
        %v255 = vpop.xlane.xlu0 %254
        %v256 = vmax.f32 %v255, 1e-24
        %v257 = vrsqrt.pop %v256
        %v258 = vmul.f32 %v257, 10.0
        %v259 = vmul.f32 %v244, %v252
        %v260 = vpack.c.bf16 %v259, %v259
        %v261 = vmul.f32 %v245, %v258
        %v262 = vpack.c.bf16 %v261, %v261
        %263 = vmatprep.subr.bf16.mxu0 0
        %264 = vmatpush1.bf16.xpose.msra.mxu0 %v262
        %265 = vmatprep.subr.bf16.mxu0 0
        %266 = vmatpush1.bf16.xpose.msra.mxu0 0
        %267 = vmatprep.subr.bf16.mxu0 0
        %268 = vmatpush1.bf16.xpose.msra.mxu0 0
        %269 = vmatprep.subr.bf16.mxu0 0
        %270 = vmatpush1.bf16.xpose.msra.mxu0 0
        %271 = vmatprep.subr.bf16.mxu0 0
        %272 = vmatpush1.bf16.xpose.msra.mxu0 0
        %273 = vmatprep.subr.bf16.mxu0 0
        %274 = vmatpush1.bf16.xpose.msra.mxu0 0
        %275 = vmatprep.subr.bf16.mxu0 0
        %276 = vmatpush1.bf16.xpose.msra.mxu0 0
        %277 = vmatprep.subr.bf16.mxu0 0
        %278 = vmatpush1.bf16.xpose.msra.mxu0 0
        %279 = vmatprep.subr.bf16.mxu0 0
        %280 = vmatpush1.bf16.xpose.msra.mxu0 0
        %281 = vmatprep.subr.bf16.mxu0 0
        %282 = vmatpush1.bf16.xpose.msra.mxu0 0
        %283 = vmatprep.subr.bf16.mxu0 0
        %284 = vmatpush1.bf16.xpose.msra.mxu0 0
        %285 = vmatprep.subr.bf16.mxu0 0
        %286 = vmatpush1.bf16.xpose.msra.mxu0 0
        %287 = vmatprep.subr.bf16.mxu0 0
        %288 = vmatpush1.bf16.xpose.msra.mxu0 0
        %289 = vmatprep.subr.bf16.mxu0 0
        %290 = vmatpush1.bf16.xpose.msra.mxu0 0
        %291 = vmatprep.subr.bf16.mxu0 0
        %292 = vmatpush1.bf16.xpose.msra.mxu0 0
        %293 = vmatprep.subr.bf16.mxu0 0
        %294 = vmatpush1.bf16.xpose.msra.mxu0 0
        %295 = vmatprep.mubr.bf16.mxu0 0
        %296 = vmatmul.mubr.bf16.gmra.mrb[0].mxu0 %v260
        %v297 = vpop.f32.mrb[0].mxu0
        %v298 = vadd.f32 0.0, %v297
        %v299 = vpop.f32.mrb[0].mxu0
        %v300 = vpop.f32.mrb[0].mxu0
        %v301 = vpop.f32.mrb[0].mxu0
        %302 = vdwg.mxu0
        %v303 = vlaneseq
        %v304 = vand.u32 %v303, 127
        %305 = vset.pattern.permute.xlu0 0
        %306 = vperm.xlu0 %305, %v246
        %v307 = vpop.permute.xlu0 %306
        %vm308 = vcmp.eq.s32.totalorder %v304, %v307
        %v309 = vsel %vm308, %v298, 0.0
        %vm310 = vcmask 64512
        %v311 = vsel %vm310, %v309, 0.0
        %312 = vadd.xlane.f32.xlu0 %v311
        %v313 = vpop.xlane.xlu0 %312
        %v314 = vsel %vm310, %v298, -inf
        %315 = vmax.xlane.f32.xlu0 %v314
        %v316 = vpop.xlane.xlu0 %315
        %v317 = vsub.f32 %v298, %v316
        %v318 = vmul.f32 %v317, 1.442695
        %v319 = vpow.pop %v318
        %v320 = vsel %vm310, %v319, 0.0
        %321 = vadd.xlane.f32.xlu0 %v320
        %v322 = vpop.xlane.xlu0 %321
        %v323 = vlog2.pop %v322
        %v324 = vmul.f32 %v323, 0.6931472
        %v325 = vadd.f32 %v316, %v324
        %v326 = vsub.f32 %v325, %v313
        %v327 = vmul.f32 %v326, %v247
        %vm328 = vcmask 7168
        %v329 = vsel %vm328, %v327, 0.0
        %v330 = vrot.slane %v329, 4
        %v331 = vadd.f32 %v329, %v330
        %v332 = vrot.slane %v331, 2
        %v333 = vadd.f32 %v331, %v332
        %v334 = vrot.slane %v333, 1
        %v335 = vadd.f32 %v333, %v334
        %v336 = vadd.f32 %v335, 0.0
        %338 = vset.pattern.permute.xlu0 0
        %339 = vperm.xlu0 %338, %v336
        %v340 = vpop.permute.xlu0 %339
        %v342 = vadd.f32 %v340, 0.0
        %343 = vst [vmem:[%s226] sm:$0x1] %v342
        %s344 = sand.u32 %s130, 1
        %s345 = scalar_lea.sflag [#allocation3], %s344
        %s346 = sand.u32 %s130, 1
        %s347 = scalar_lea.vmem [#allocation2], %s346
        // Predicated region
        $region37: #{tpu_custom_call.1} parent=35 // pred_check
          %p348 = pneg %p140
        $region38: #{tpu_custom_call.1} parent=35 // pred_check_branch
          %350 = sbr.rel (%p348) target = $region40
        $region39: #{tpu_custom_call.1} parent=35 // pred_region
          %s352 = ssub.s32 16, 16
          %353 = vsyncadd %s345, %s352
          %s354 = smul.addr %s18, 16
          %s355 = scalar_lea.hbm %s4, %s354
          %s357 = sshll.u32 %s347, 4
          %s358 = int_to_ptr.vmem [resolvable:$true] %s357
          %360 = dma.vmem_to_hbm [thread:$0]  %s358, 16, %s355, %s345
        $region40: #{tpu_custom_call.1} parent=35 // pred_fallthru
          _
      $region36: #{tpu_custom_call.1} parent=5 // pred_fallthru
        _
      %p361 = scmp.le.s32.totalorder 2, %s13
      // Predicated region
      $region41: #{tpu_custom_call.1} parent=5 // pred_check
        %p362 = pneg %p361
      $region42: #{tpu_custom_call.1} parent=5 // pred_check_branch
        %364 = sbr.rel (%p362) target = $region44
      $region43: #{tpu_custom_call.1} parent=5 // pred_region
        %s365 = ssub.s32 %s13, 2
        // Predicated region
        $region45: #{tpu_custom_call.1} parent=43 // pred_check
          %p366 = pneg %p146
        $region46: #{tpu_custom_call.1} parent=43 // pred_check_branch
          %368 = sbr.rel (%p366) target = $region48
        $region47: #{tpu_custom_call.1} parent=43 // pred_region
          %s369 = sand.u32 %s131, 1
          %s370 = scalar_lea.sflag [#allocation3], %s369
          %s371 = sand.u32 %s131, 1
          %s372 = scalar_lea.vmem [#allocation2], %s371
          %373 = dma.done %s370, 16
        $region48: #{tpu_custom_call.1} parent=43 // pred_fallthru
          _
      $region44: #{tpu_custom_call.1} parent=5 // pred_fallthru
        _
    $region6: #{tpu_custom_call.1} parent=1 // loop_footer
      %s17 = sadd.s32 1, %s13
    $region7: #{tpu_custom_call.1} parent=1 // loop_footer_branch
      %12 = sbr.rel target = $region3
    $region8: #{tpu_custom_call.1} parent=1 // loop_exit
      _
    %374 = vsyncpa [#allocation3], 1
    %s375 = scalar_lea.sflag [#allocation3], 1
    %376 = vsyncpa %s375, 1

</llo_original>
